<compile_context>
chip_gen: v5e
topology: v5e:2x2
jax: 0.10.0
libtpu: 0.0.40
codegen_flags: <defaults>
</compile_context>

<pallas_src>
import jax
import jax.numpy as jnp
from jax import lax
from jax.experimental import pallas as pl
from jax.experimental.pallas import tpu as pltpu

# ----------------------------- tiling policy ---------------------------------

_TARGET_STEP_BYTES = 12 << 20   # sum of all blocks per grid step (~24 MiB dbl-buffered)
_MIN_SPLIT_BYTES = 2 << 20      # split a lone block only if each half >= 2 MiB (v7x 2 TCs)
_ROW_ALIGN = 16                 # sublane granularity; 16 also covers bf16 packing


def _round_up(n, m):
    return ((n + m - 1) // m) * m


def _cdiv(a, b):
    return (a + b - 1) // b


def _batch_tiling(batch, bytes_per_row):
    """Return (padded_batch, batch_tile); grid = padded_batch // batch_tile."""
    padded = _round_up(batch, _ROW_ALIGN)
    tile = max(_ROW_ALIGN,
               _round_up(_TARGET_STEP_BYTES // max(bytes_per_row, 1), _ROW_ALIGN))
    if padded <= tile:
        # Single block would cover everything; split in two only if each half is
        # still big enough that per-step overhead stays negligible (feeds both
        # v7x TensorCores via dimension_semantics=("parallel",)).
        half = _round_up(_cdiv(padded, 2), _ROW_ALIGN)
        if half * bytes_per_row >= _MIN_SPLIT_BYTES:
            return 2 * half, half
        return padded, padded
    # Balance blocks so the last one is not mostly padding.
    nblk = _cdiv(padded, tile)
    tile = _round_up(_cdiv(padded, nblk), _ROW_ALIGN)
    padded = _round_up(padded, tile)
    return padded, tile


_CPARAMS = pltpu.CompilerParams(
    dimension_semantics=("parallel",),
    vmem_limit_bytes=48 * 1024 * 1024,   # > v5e's 16 MiB default, < v7x physical 64 MiB
)

# ----------------------------- 'every' kernels -------------------------------
# x_ref:     (2, TB, H) x.dtype -- the two active channels, horizon lane-dense
# g_ref:     (2, TB, 1) f32     -- per-batch goal xy
# score_ref: (TB, 1)    f32     -- sum_h exp(-||diff||)
# grad_ref:  (2, TB, H) x.dtype -- d score / d (active channels)


def _every_fwd_kernel(x_ref, g_ref, score_ref):
    d0 = x_ref[0].astype(jnp.float32) - g_ref[0]       # (TB, H) - (TB, 1)
    d1 = x_ref[1].astype(jnp.float32) - g_ref[1]
    r = jnp.sqrt(d0 * d0 + d1 * d1)
    score_ref[...] = jnp.sum(jnp.exp(-r), axis=-1, keepdims=True)


def _every_fwd_grad_kernel(x_ref, g_ref, score_ref, grad_ref):
    d0 = x_ref[0].astype(jnp.float32) - g_ref[0]
    d1 = x_ref[1].astype(jnp.float32) - g_ref[1]
    s = d0 * d0 + d1 * d1
    # One EUP transcendental (rsqrt) instead of sqrt + divide; safe subgradient at s == 0.
    inv_r = jnp.where(s > 0.0, lax.rsqrt(s), 0.0)
    r = s * inv_r                                        # == sqrt(s), and 0 at s == 0
    e = jnp.exp(-r)
    score_ref[...] = jnp.sum(e, axis=-1, keepdims=True)
    coef = -e * inv_r
    grad_ref[0] = (coef * d0).astype(grad_ref.dtype)
    grad_ref[1] = (coef * d1).astype(grad_ref.dtype)


# ------------------------------ 'last' kernels --------------------------------
# x_ref, g_ref: (Dg, B) f32  -- batch lane-dense; whole array, no grid
# score_ref:    (1, B)  f32
# grad_ref:     (Dg, B) x.dtype


def _last_fwd_kernel(x_ref, g_ref, score_ref):
    diff = x_ref[...] - g_ref[...]
    r = jnp.sqrt(jnp.sum(diff * diff, axis=0, keepdims=True))   # (1, B)
    score_ref[...] = jnp.exp(-r)


def _last_fwd_grad_kernel(x_ref, g_ref, score_ref, grad_ref):
    diff = x_ref[...] - g_ref[...]
    s = jnp.sum(diff * diff, axis=0, keepdims=True)
    inv_r = jnp.where(s > 0.0, lax.rsqrt(s), 0.0)
    e = jnp.exp(-(s * inv_r))
    score_ref[...] = e
    grad_ref[...] = ((-e * inv_r) * diff).astype(grad_ref.dtype)


# ------------------------------- wrappers -------------------------------------


def _every_forward(x, goal, c0, with_grad=False):
    """'every' mode. Returns score (B,) and, if with_grad, the active-channel
    gradient in channels-first layout (2, B, H), dtype x.dtype."""
    B, H, _ = x.shape
    # Layout plumbing (plain XLA): keep only the 2 active channels in x's native
    # dtype, horizon lane-dense; goal xy as a per-batch f32 column.
    xa = jnp.transpose(x[..., c0:c0 + 2], (2, 0, 1))                            # (2, B, H)
    ga = jnp.transpose(goal[:, :2].astype(jnp.float32), (1, 0))[:, :, None]     # (2, B, 1)

    itemsize = jnp.dtype(x.dtype).itemsize
    row_bytes = 2 * H * itemsize + 2 * 4 + 4
    if with_grad:
        row_bytes += 2 * H * itemsize
    Bp, TB = _batch_tiling(B, row_bytes)
    if Bp != B:
        xa = jnp.pad(xa, ((0, 0), (0, Bp - B), (0, 0)))
        ga = jnp.pad(ga, ((0, 0), (0, Bp - B), (0, 0)))

    grid = (Bp // TB,)
    in_specs = [pl.BlockSpec((2, TB, H), lambda i: (0, i, 0)),
                pl.BlockSpec((2, TB, 1), lambda i: (0, i, 0))]
    score_spec = pl.BlockSpec((TB, 1), lambda i: (i, 0))

    if not with_grad:
        score = pl.pallas_call(
            _every_fwd_kernel,
            out_shape=jax.ShapeDtypeStruct((Bp, 1), jnp.float32),
            grid=grid, in_specs=in_specs, out_specs=score_spec,
            compiler_params=_CPARAMS,
        )(xa, ga)
        return score[:B, 0]

    score, gact = pl.pallas_call(
        _every_fwd_grad_kernel,
        out_shape=(jax.ShapeDtypeStruct((Bp, 1), jnp.float32),
                   jax.ShapeDtypeStruct((2, Bp, H), x.dtype)),
        grid=grid, in_specs=in_specs,
        out_specs=(score_spec, pl.BlockSpec((2, TB, H), lambda i: (0, i, 0))),
        compiler_params=_CPARAMS,
    )(xa, ga)
    return score[:B, 0], gact[:, :B, :]


def _last_forward_jnp(x, goal, with_grad=False):
    """'last' mode, plain jnp: the problem is ~B*Dg*4 bytes, so XLA fusion into
    the surrounding diffusion step beats any pallas_call launch overhead."""
    xl = x[:, -1, 2:].astype(jnp.float32)
    gl = goal.astype(jnp.float32)
    diff = xl - gl
    s = jnp.sum(diff * diff, axis=-1)
    score = jnp.exp(-jnp.sqrt(s))
    if not with_grad:
        return score
    inv_r = jnp.where(s > 0.0, lax.rsqrt(s), 0.0)
    glast = (-score * inv_r)[:, None] * diff
    grad = jnp.zeros(x.shape, x.dtype).at[:, -1, 2:].set(glast.astype(x.dtype))
    return score, grad


def _last_forward_pallas(x, goal, with_grad=False):
    """Pallas variant of 'last' (single call, no grid, full-extent blocks)."""
    B = x.shape[0]
    Dg = goal.shape[-1]
    # Only x[:, -1, 2:] is ever read -> slice before the kernel; batch lane-dense.
    xl = x[:, -1, 2:].astype(jnp.float32).T        # (Dg, B)
    gl = goal.astype(jnp.float32).T                # (Dg, B)
    if not with_grad:
        score = pl.pallas_call(
            _last_fwd_kernel,
            out_shape=jax.ShapeDtypeStruct((1, B), jnp.float32),
        )(xl, gl)
        return score[0]
    score, glast = pl.pallas_call(
        _last_fwd_grad_kernel,
        out_shape=(jax.ShapeDtypeStruct((1, B), jnp.float32),
                   jax.ShapeDtypeStruct((Dg, B), x.dtype)),
    )(xl, gl)
    grad = jnp.zeros(x.shape, x.dtype).at[:, -1, 2:].set(glast.T.astype(x.dtype))
    return score[0], grad


# -------------------------------- module --------------------------------------


class TrueValueGuide:
    """JAX/Pallas port of diffuser.guides.policies.TrueValueGuide."""

    def __init__(self, func_type, horizon, use_pallas_last=False):
        self.horizon = horizon
        self.func_type = func_type
        self.use_pallas_last = use_pallas_last

    @staticmethod
    def _active_offset(x, goal):
        # tiled goal shape == x shape  <=>  goal dim == x dim
        return 0 if goal.shape[-1] == x.shape[-1] else 2

    def __call__(self, x, cond, t=None):
        del t  # unused, mirrors the torch signature
        goal = cond[self.horizon - 1]
        if self.func_type == 'every':
            c0 = self._active_offset(x, goal)
            row_score = _every_forward(x, goal, c0)
        elif self.func_type == 'last':
            assert x.shape[-1] - 2 == goal.shape[-1], "last_value: x[...,2:] vs goal dim mismatch"
            if self.use_pallas_last:
                row_score = _last_forward_pallas(x, goal)
            else:
                row_score = _last_forward_jnp(x, goal)
        else:
            raise ValueError(self.func_type)
        # torch .squeeze(dim=-1) on a (B,) tensor only squeezes when B == 1.
        if row_score.shape[-1] == 1:
            row_score = jnp.squeeze(row_score, axis=-1)
        return row_score

    def gradients(self, x, cond, t=None):
        """Return (y, d y.sum()/d x) — analytic, fused into the forward kernel.
        The returned gradient matches the torch contract (shaped like x)."""
        del t
        goal = cond[self.horizon - 1]
        if self.func_type == 'every':
            c0 = self._active_offset(x, goal)
            y, gact = _every_forward(x, goal, c0, with_grad=True)
            # TODO(synk): a guidance sampler should consume `gact` (2, B, H) directly
            # (see gradients_active) or fuse x += scale*grad via input_output_aliases;
            # this scatter is kept only for the torch-shaped contract and costs an
            # extra full-trajectory HBM pass.
            grad = jnp.zeros(x.shape, x.dtype)
            grad = grad.at[..., c0:c0 + 2].set(jnp.transpose(gact, (1, 2, 0)).astype(x.dtype))
        elif self.func_type == 'last':
            assert x.shape[-1] - 2 == goal.shape[-1], "last_value: x[...,2:] vs goal dim mismatch"
            if self.use_pallas_last:
                y, grad = _last_forward_pallas(x, goal, with_grad=True)
            else:
                y, grad = _last_forward_jnp(x, goal, with_grad=True)
        else:
            raise ValueError(self.func_type)
        if y.shape[-1] == 1:
            y = jnp.squeeze(y, axis=-1)
        return y, grad

    def gradients_active(self, x, cond, t=None):
        """'every' only: (y, grad_active, c0) with grad_active in channels-first
        (2, B, H) layout — the kernel's native output, no zeros/scatter pass."""
        del t
        assert self.func_type == 'every'
        goal = cond[self.horizon - 1]
        c0 = self._active_offset(x, goal)
        y, gact = _every_forward(x, goal, c0, with_grad=True)
        if y.shape[-1] == 1:
            y = jnp.squeeze(y, axis=-1)
        return y, gact, c0


# --------------------------- reference & demo ----------------------------------


def _ref_forward(func_type, horizon, x, cond):
    goal = cond[horizon - 1]
    if func_type == 'every':
        goal_t = jnp.tile(goal[:, None, :], (1, x.shape[1], 1))
        if goal_t.shape == x.shape:
            goal_t = goal_t.at[..., 2:].set(x[..., 2:])
            dist = -jnp.linalg.norm(x - goal_t, axis=-1)
        else:
            goal_t = goal_t.at[..., 2:].set(x[..., 4:])
            dist = -jnp.linalg.norm(x[..., 2:] - goal_t, axis=-1)
        return jnp.exp(dist).sum(-1)
    dist = -jnp.linalg.norm(x[:, -1, 2:] - goal, axis=-1)
    return jnp.exp(dist)


if __name__ == "__main__":
    key = jax.random.PRNGKey(0)
    B, H, Dx, Dg = 2, 8, 6, 4          # maze2d-style: 2 action dims + 4 obs dims
    k1, k2, k3 = jax.random.split(key, 3)

    x = jax.random.normal(k1, (B, H, Dx), dtype=jnp.float32)
    goal = jax.random.normal(k2, (B, Dg), dtype=jnp.float32)
    cond = {H - 1: goal}
    t = jnp.zeros((B,), dtype=jnp.int32)   # unused, mirrors the torch signature

    # 'every', goal dim != x dim  (active channels 2:4)
    guide_every = TrueValueGuide('every', horizon=H)
    out = jax.block_until_ready(guide_every(x, cond, t))
    ref = _ref_forward('every', H, x, cond)
    assert jnp.allclose(out, ref, atol=1e-5, rtol=1e-5)

    # 'every', goal dim == x dim  (active channels 0:2)
    x_same = jax.random.normal(k3, (B, H, Dg), dtype=jnp.float32)
    out_s = jax.block_until_ready(guide_every(x_same, cond, t))
    ref_s = _ref_forward('every', H, x_same, cond)
    assert jnp.allclose(out_s, ref_s, atol=1e-5, rtol=1e-5)

    # 'last' — default plain-jnp path (per perf review) and the Pallas variant
    guide_last = TrueValueGuide('last', horizon=H)
    out_l = jax.block_until_ready(guide_last(x, cond, t))
    ref_l = _ref_forward('last', H, x, cond)
    assert jnp.allclose(out_l, ref_l, atol=1e-5, rtol=1e-5)

    guide_last_pl = TrueValueGuide('last', horizon=H, use_pallas_last=True)
    out_lp = jax.block_until_ready(guide_last_pl(x, cond, t))
    assert jnp.allclose(out_lp, ref_l, atol=1e-5, rtol=1e-5)

    # fused analytic gradients vs autodiff of the plain-jnp reference
    y_e, g_e = jax.block_until_ready(guide_every.gradients(x, cond, t))
    ref_ge = jax.grad(lambda xx: _ref_forward('every', H, xx, cond).sum())(x)
    assert jnp.allclose(y_e, ref, atol=1e-5, rtol=1e-5)
    assert jnp.allclose(g_e, ref_ge, atol=1e-5, rtol=1e-5)

    # channels-first gradient path (no scatter) agrees with the packed one
    y_a, g_a, c0 = jax.block_until_ready(guide_every.gradients_active(x, cond, t))
    assert jnp.allclose(y_a, ref, atol=1e-5, rtol=1e-5)
    assert jnp.allclose(jnp.transpose(g_a, (1, 2, 0)), ref_ge[..., c0:c0 + 2],
                        atol=1e-5, rtol=1e-5)

    y_l, g_l = jax.block_until_ready(guide_last.gradients(x, cond, t))
    ref_gl = jax.grad(lambda xx: _ref_forward('last', H, xx, cond).sum())(x)
    assert jnp.allclose(y_l, ref_l, atol=1e-5, rtol=1e-5)
    assert jnp.allclose(g_l, ref_gl, atol=1e-5, rtol=1e-5)

    y_lp, g_lp = jax.block_until_ready(guide_last_pl.gradients(x, cond, t))
    assert jnp.allclose(y_lp, ref_l, atol=1e-5, rtol=1e-5)
    assert jnp.allclose(g_lp, ref_gl, atol=1e-5, rtol=1e-5)

    print("KERNEL_OK")
</pallas_src>

<mosaic_0001>
module attributes {stable_mosaic.version = 11 : i64} {
  func.func @_every_fwd_kernel(%arg0: i32, %arg1: memref<2x16x8xf32, #tpu.memory_space<vmem>>, %arg2: memref<2x16x1xf32, #tpu.memory_space<vmem>>, %arg3: memref<16x1xf32, #tpu.memory_space<vmem>>) attributes {dimension_semantics = [#tpu.dimension_semantics<parallel>], iteration_bounds = array<i64: 1>, scalar_prefetch = 0 : i64, scratch_operands = 0 : i64, tpu.core_type = #tpu.core_type<tc>, window_params = [{transform_indices = @transform_0, window_bounds = array<i64: 2, 16, 8>}, {transform_indices = @transform_1, window_bounds = array<i64: 2, 16, 1>}, {transform_indices = @transform_2, window_bounds = array<i64: 16, 1>}]} {
    %c0 = arith.constant 0 : index
    %c0_0 = arith.constant 0 : index
    %c0_1 = arith.constant 0 : index
    %0 = vector.load %arg1[%c0, %c0_0, %c0_1] : memref<2x16x8xf32, #tpu.memory_space<vmem>>, vector<1x16x8xf32>
    %1 = vector.shape_cast %0 : vector<1x16x8xf32> to vector<16x8xf32>
    %c0_2 = arith.constant 0 : index
    %c0_3 = arith.constant 0 : index
    %c0_4 = arith.constant 0 : index
    %2 = vector.load %arg2[%c0_2, %c0_3, %c0_4] : memref<2x16x1xf32, #tpu.memory_space<vmem>>, vector<1x16x1xf32>
    %3 = vector.shape_cast %2 : vector<1x16x1xf32> to vector<16x1xf32>
    %4 = vector.broadcast %3 : vector<16x1xf32> to vector<16x8xf32>
    %5 = arith.subf %1, %4 : vector<16x8xf32>
    %c1 = arith.constant 1 : index
    %c0_5 = arith.constant 0 : index
    %c0_6 = arith.constant 0 : index
    %6 = vector.load %arg1[%c1, %c0_5, %c0_6] : memref<2x16x8xf32, #tpu.memory_space<vmem>>, vector<1x16x8xf32>
    %7 = vector.shape_cast %6 : vector<1x16x8xf32> to vector<16x8xf32>
    %c1_7 = arith.constant 1 : index
    %c0_8 = arith.constant 0 : index
    %c0_9 = arith.constant 0 : index
    %8 = vector.load %arg2[%c1_7, %c0_8, %c0_9] : memref<2x16x1xf32, #tpu.memory_space<vmem>>, vector<1x16x1xf32>
    %9 = vector.shape_cast %8 : vector<1x16x1xf32> to vector<16x1xf32>
    %10 = vector.broadcast %9 : vector<16x1xf32> to vector<16x8xf32>
    %11 = arith.subf %7, %10 : vector<16x8xf32>
    %12 = arith.mulf %5, %5 : vector<16x8xf32>
    %13 = arith.mulf %11, %11 : vector<16x8xf32>
    %14 = arith.addf %12, %13 : vector<16x8xf32>
    %15 = math.sqrt %14 : vector<16x8xf32>
    %cst = arith.constant 0.000000e+00 : f32
    %16 = vector.broadcast %cst : f32 to vector<16x8xf32>
    %17 = arith.subf %16, %15 : vector<16x8xf32>
    %18 = math.exp %17 : vector<16x8xf32>
    %cst_10 = arith.constant dense<0.000000e+00> : vector<16xf32>
    %19 = vector.multi_reduction <add>, %18, %cst_10 [1] : vector<16x8xf32> to vector<16xf32>
    %20 = vector.shape_cast %19 : vector<16xf32> to vector<16x1xf32>
    %c0_11 = arith.constant 0 : index
    %c0_12 = arith.constant 0 : index
    %21 = vector.load %arg3[%c0_11, %c0_12] : memref<16x1xf32, #tpu.memory_space<vmem>>, vector<16x1xf32>
    tpu.vector_store %arg3[%c0_11, %c0_12], %20 {strides = array<i32>} : memref<16x1xf32, #tpu.memory_space<vmem>>, vector<16x1xf32>,
    return
  }
  func.func @transform_0(%arg0: i32) -> (i32, i32, i32) {
    %c0_i32 = arith.constant 0 : i32
    %c0_i32_0 = arith.constant 0 : i32
    %c0_i32_1 = arith.constant 0 : i32
    return %c0_i32, %arg0, %c0_i32_0 : i32, i32, i32
  }
  func.func @transform_1(%arg0: i32) -> (i32, i32, i32) {
    %c0_i32 = arith.constant 0 : i32
    %c0_i32_0 = arith.constant 0 : i32
    %c0_i32_1 = arith.constant 0 : i32
    return %c0_i32, %arg0, %c0_i32_0 : i32, i32, i32
  }
  func.func @transform_2(%arg0: i32) -> (i32, i32) {
    %c0_i32 = arith.constant 0 : i32
    %c0_i32_0 = arith.constant 0 : i32
    return %arg0, %c0_i32 : i32, i32
  }
}

</mosaic_0001>

<llo_original>
// kernel: tpu_custom_call.1
$region0: #{tpu_custom_call.1}
  #allocation0 [shape = 'u32[]', space=smem, size = 0x4, offset = 0x4, fixed_abs, tag = 'smem constant byte address 0x4 - core index']
  #allocation1 [shape = 'u32[72,128]{1,0:T(1,128)}', space=vmem, size = 0x9000, scoped, tag = 'internal scratch']
  %s0 = inlined_call_operand.vmem [shape: f32[2,16,8], index: 0, kind: input, shape index: {}]
  %s1 = inlined_call_operand.vmem [shape: f32[2,16,1], index: 1, kind: input, shape index: {}]
  %s2 = inlined_call_operand.vmem [shape: f32[16,1], index: 2, kind: output, shape index: {}]
  %s3 = sld [smem:[#allocation0]]
  $region18: #{tpu_custom_call.1} parent=0
    _
  %s5 = ssub.s32 1, %s3
  %s6 = scalar_select 0, %s5, %s3
  // Predicated region
  $region2: #{tpu_custom_call.1} parent=0 // pred_check
    _
  $region3: #{tpu_custom_call.1} parent=0 // pred_check_branch
    %8 = sbr.rel (0) target = $region5
  $region4: #{tpu_custom_call.1} parent=0 // pred_region
    _
  $region5: #{tpu_custom_call.1} parent=0 // pred_fallthru
    _
  // Predicated region
  $region6: #{tpu_custom_call.1} parent=0 // pred_check
    _
  $region7: #{tpu_custom_call.1} parent=0 // pred_check_branch
    %10 = sbr.rel (0) target = $region9
  $region8: #{tpu_custom_call.1} parent=0 // pred_region
    _
  $region9: #{tpu_custom_call.1} parent=0 // pred_fallthru
    _
  %v11 = vld [vmem:[%s0] sm:$0xff]
  %v12 = vld [vmem:[%s0 + $0x8] sm:$0xff]
  %v13 = vld [vmem:[%s1] sm:$0xff]
  %v14 = vld [vmem:[%s1 + $0x8] sm:$0xff]
  %16 = vset.pattern.permute.xlu0 0
  %17 = vperm.xlu0 %16, %v13
  %v18 = vpop.permute.xlu0 %17
  %21 = vset.pattern.permute.xlu0 0
  %22 = vperm.xlu0 %21, %v14
  %v23 = vpop.permute.xlu0 %22
  %v25 = vsub.f32 %v11, %v18
  %v26 = vsub.f32 %v12, %v23
  %s27 = scalar_lea.vmem %s0, 16
  %v28 = vld [vmem:[%s27] sm:$0xff]
  %v29 = vld [vmem:[%s27 + $0x8] sm:$0xff]
  %s30 = scalar_lea.vmem %s1, 16
  %v31 = vld [vmem:[%s30] sm:$0xff]
  %v32 = vld [vmem:[%s30 + $0x8] sm:$0xff]
  %34 = vset.pattern.permute.xlu0 0
  %35 = vperm.xlu0 %34, %v31
  %v36 = vpop.permute.xlu0 %35
  %39 = vset.pattern.permute.xlu0 0
  %40 = vperm.xlu0 %39, %v32
  %v41 = vpop.permute.xlu0 %40
  %v43 = vsub.f32 %v28, %v36
  %v44 = vsub.f32 %v29, %v41
  %v45 = vmul.f32 %v25, %v25
  %v46 = vmul.f32 %v26, %v26
  %v47 = vmul.f32 %v43, %v43
  %v48 = vmul.f32 %v44, %v44
  %v49 = vadd.f32 %v45, %v47
  %v50 = vadd.f32 %v46, %v48
  %v51 = vrsqrt.pop %v49
  %v52 = vmul.f32 %v51, %v49
  %v53 = vmul.f32 %v52, %v51
  %v54 = vmul.f32 0.5, %v53
  %v55 = vsub.f32 1.5, %v54
  %v56 = vmul.f32 %v51, %v55
  %v57 = vmul.f32 %v49, %v56
  %vm58 = vcmp.eq.f32.partialorder %v49, inf
  %v59 = vsel %vm58, %v49, %v57
  %vm60 = vcmp.eq.f32.partialorder %v49, 0.0
  %v61 = vand.u32 %v49, 2147483648
  %v62 = vsel %vm60, %v61, %v59
  %v63 = vrsqrt.pop %v50
  %v64 = vmul.f32 %v63, %v50
  %v65 = vmul.f32 %v64, %v63
  %v66 = vmul.f32 0.5, %v65
  %v67 = vsub.f32 1.5, %v66
  %v68 = vmul.f32 %v63, %v67
  %v69 = vmul.f32 %v50, %v68
  %vm70 = vcmp.eq.f32.partialorder %v50, inf
  %v71 = vsel %vm70, %v50, %v69
  %vm72 = vcmp.eq.f32.partialorder %v50, 0.0
  %v73 = vand.u32 %v50, 2147483648
  %v74 = vsel %vm72, %v73, %v71
  %v75 = vsub.f32 0.0, %v62
  %v76 = vsub.f32 0.0, %v74
  %v77 = vmul.f32 %v75, 1.442695
  %v78 = vpow.pop %v77
  %v79 = vmul.f32 %v76, 1.442695
  %v80 = vpow.pop %v79
  %vm81 = vcmask 64512
  %v82 = vsel %vm81, %v78, 0.0
  %83 = vadd.xlane.f32.xlu0 %v82
  %v84 = vpop.xlane.xlu0 %83
  %v85 = vsel %vm81, %v80, 0.0
  %86 = vadd.xlane.f32.xlu0 %v85
  %v87 = vpop.xlane.xlu0 %86
  %vm88 = vcmask 7168
  %89 = vst.msk [vmem:[%s2] sm:$0xff] %vm88, %v84
  %90 = vst.msk [vmem:[%s2 + $0x8] sm:$0xff] %vm88, %v87
  // Predicated region
  $region10: #{tpu_custom_call.1} parent=0 // pred_check
    _
  $region11: #{tpu_custom_call.1} parent=0 // pred_check_branch
    %92 = sbr.rel (0) target = $region13
  $region12: #{tpu_custom_call.1} parent=0 // pred_region
    _
  $region13: #{tpu_custom_call.1} parent=0 // pred_fallthru
    _
  // Predicated region
  $region14: #{tpu_custom_call.1} parent=0 // pred_check
    _
  $region15: #{tpu_custom_call.1} parent=0 // pred_check_branch
    %94 = sbr.rel (0) target = $region17
  $region16: #{tpu_custom_call.1} parent=0 // pred_region
    _
  $region17: #{tpu_custom_call.1} parent=0 // pred_fallthru
    _

</llo_original>
